<compile_context>
chip_gen: v5e
topology: v5e:2x2
jax: 0.10.0
libtpu: 0.0.40
codegen_flags: <defaults>
</compile_context>

<pallas_src>
import math

import jax
import jax.numpy as jnp
from jax.experimental import pallas as pl
from jax.experimental.pallas import tpu as pltpu


def _sinusoidal_kernel(t_ref, freqs_ref, phase_ref, o_ref):
    # t_ref:     (TB, W) packed timesteps, or (TB, 1) when not packing
    # freqs_ref: (1, W)  duplicated/tiled frequency row (grid-invariant)
    # phase_ref: (1, W)  0 for sin-half lanes, pi/2 for cos-half lanes
    # o_ref:     (TB, W) output tile (lane-dense single store)
    rows, width = o_ref.shape
    t = jnp.broadcast_to(t_ref[...], (rows, width))      # lane broadcast if (TB,1)
    f = jnp.broadcast_to(freqs_ref[...], (rows, width))  # sublane broadcast
    p = jnp.broadcast_to(phase_ref[...], (rows, width))  # sublane broadcast
    # sin(x) | sin(x + pi/2) == sin | cos, written in ONE full-width store.
    o_ref[...] = jnp.sin(t * f + p).astype(o_ref.dtype)


def _pick_row_tile(rows: int, row_width: int, budget_bytes: int = 2 << 20) -> int:
    """Row tile: multiple of 8, <=1024 rows, <= ~2 MiB per buffered tile."""
    max_rows_by_vmem = max(8, budget_bytes // (row_width * 4))
    tile = min(1024, max_rows_by_vmem)
    tile = max(8, (tile // 8) * 8)
    if rows <= tile:
        return rows  # single block == full array dim (always a legal block shape)
    return tile      # ragged tail (rows % tile != 0) is masked by Pallas


def sinusoidal_pos_emb(t: jax.Array, dim: int, out_dtype=jnp.float32) -> jax.Array:
    """Pallas TPU implementation of SinusoidalPosEmb(dim)(t).

    out_dtype: set to jnp.bfloat16 if the downstream time-MLP is bf16 (halves
    the output HBM bytes; the cast happens at the final store).
    """
    assert t.ndim == 1, "t must be 1-D (batch of timesteps)"
    assert dim % 2 == 0, "dim must be even"
    assert dim >= 4, "dim must be >= 4 (half_dim - 1 must be nonzero)"

    B = t.shape[0]
    half_dim = dim // 2
    emb_factor = math.log(10000.0) / (half_dim - 1)

    # Static tables (constant-folded under jit): duplicated freqs + phase row.
    freqs = jnp.exp(jnp.arange(half_dim, dtype=jnp.float32) * (-emb_factor))
    freqs_full = jnp.concatenate([freqs, freqs])                       # (dim,)
    phase_full = jnp.concatenate(
        [jnp.zeros((half_dim,), jnp.float32),
         jnp.full((half_dim,), 0.5 * math.pi, jnp.float32)])           # (dim,)

    t_f32 = t.astype(jnp.float32)

    # Row packing: k logical rows per 128-lane output row when dim < 128.
    k = 1
    if dim < 128 and 128 % dim == 0 and B % (128 // dim) == 0:
        k = 128 // dim

    if k > 1:
        W = k * dim                       # == 128
        rows = B // k
        # t_in[r, j*dim + c] = t[r*k + j]  (wrapper-side layout plumbing only)
        t_in = jnp.repeat(t_f32.reshape(rows, k), dim, axis=1)         # (rows, W)
        freqs_row = jnp.tile(freqs_full, k).reshape(1, W)
        phase_row = jnp.tile(phase_full, k).reshape(1, W)
        t_block_w = W
    else:
        W = dim
        rows = B
        t_in = t_f32.reshape(rows, 1)
        freqs_row = freqs_full.reshape(1, W)
        phase_row = phase_full.reshape(1, W)
        t_block_w = 1

    tb = _pick_row_tile(rows, W)
    grid = (pl.cdiv(rows, tb),)

    out_packed = pl.pallas_call(
        _sinusoidal_kernel,
        out_shape=jax.ShapeDtypeStruct((rows, W), out_dtype),
        grid=grid,
        in_specs=[
            pl.BlockSpec((tb, t_block_w), lambda i: (i, 0)),
            pl.BlockSpec((1, W), lambda i: (0, 0)),
            pl.BlockSpec((1, W), lambda i: (0, 0)),
        ],
        out_specs=pl.BlockSpec((tb, W), lambda i: (i, 0)),
        compiler_params=pltpu.CompilerParams(
            dimension_semantics=("parallel",)
        ),
    )(t_in, freqs_row, phase_row)

    # Un-pack: packed row r holds logical rows r*k .. r*k+k-1 contiguously,
    # so this reshape is a free, contiguous view change.
    return out_packed.reshape(B, dim)


def _reference(t: jax.Array, dim: int) -> jax.Array:
    half_dim = dim // 2
    emb_factor = math.log(10000.0) / (half_dim - 1)
    emb = jnp.exp(jnp.arange(half_dim, dtype=jnp.float32) * -emb_factor)
    emb = t.astype(jnp.float32)[:, None] * emb[None, :]
    return jnp.concatenate([jnp.sin(emb), jnp.cos(emb)], axis=-1)


if __name__ == "__main__":
    key = jax.random.PRNGKey(0)

    # DDPM-like small shape: dim=32 -> packed path (k = 4 rows per 128 lanes).
    B, dim = 8, 32
    t = jax.random.randint(key, (B,), 0, 1000).astype(jnp.float32)
    out = jax.block_until_ready(sinusoidal_pos_emb(t, dim))
    ref = _reference(t, dim)
    assert out.shape == (B, dim), f"bad shape {out.shape}"
    assert bool(jnp.allclose(out, ref, atol=1e-4, rtol=1e-4)), "mismatch (packed)"

    # Second tiny shape exercising the unpacked (k=1, masked-lane) fallback.
    B2, dim2 = 8, 20  # 128 % 20 != 0 -> no packing
    t2 = jax.random.randint(jax.random.PRNGKey(1), (B2,), 0, 1000).astype(jnp.float32)
    out2 = jax.block_until_ready(sinusoidal_pos_emb(t2, dim2))
    ref2 = _reference(t2, dim2)
    assert out2.shape == (B2, dim2), f"bad shape {out2.shape}"
    assert bool(jnp.allclose(out2, ref2, atol=1e-4, rtol=1e-4)), "mismatch (unpacked)"

    print("KERNEL_OK")
</pallas_src>

<mosaic_0001>
module attributes {stable_mosaic.version = 11 : i64} {
  func.func @_sinusoidal_kernel(%arg0: i32, %arg1: memref<2x128xf32, #tpu.memory_space<vmem>>, %arg2: memref<1x128xf32, #tpu.memory_space<vmem>>, %arg3: memref<1x128xf32, #tpu.memory_space<vmem>>, %arg4: memref<2x128xf32, #tpu.memory_space<vmem>>) attributes {dimension_semantics = [#tpu.dimension_semantics<parallel>], iteration_bounds = array<i64: 1>, scalar_prefetch = 0 : i64, scratch_operands = 0 : i64, tpu.core_type = #tpu.core_type<tc>, window_params = [{transform_indices = @transform_0, window_bounds = array<i64: 2, 128>}, {pipeline_mode = #tpu.pipeline_mode<synchronous>, transform_indices = @transform_1, window_bounds = array<i64: 1, 128>}, {pipeline_mode = #tpu.pipeline_mode<synchronous>, transform_indices = @transform_2, window_bounds = array<i64: 1, 128>}, {transform_indices = @transform_3, window_bounds = array<i64: 2, 128>}]} {
    %c0 = arith.constant 0 : index
    %c0_0 = arith.constant 0 : index
    %0 = vector.load %arg1[%c0, %c0_0] : memref<2x128xf32, #tpu.memory_space<vmem>>, vector<2x128xf32>
    %c0_1 = arith.constant 0 : index
    %c0_2 = arith.constant 0 : index
    %1 = vector.load %arg2[%c0_1, %c0_2] : memref<1x128xf32, #tpu.memory_space<vmem>>, vector<1x128xf32>
    %2 = vector.shape_cast %1 : vector<1x128xf32> to vector<1x128xf32>
    %3 = vector.broadcast %2 : vector<1x128xf32> to vector<2x128xf32>
    %c0_3 = arith.constant 0 : index
    %c0_4 = arith.constant 0 : index
    %4 = vector.load %arg3[%c0_3, %c0_4] : memref<1x128xf32, #tpu.memory_space<vmem>>, vector<1x128xf32>
    %5 = vector.shape_cast %4 : vector<1x128xf32> to vector<1x128xf32>
    %6 = vector.broadcast %5 : vector<1x128xf32> to vector<2x128xf32>
    %7 = arith.mulf %0, %3 : vector<2x128xf32>
    %8 = arith.addf %7, %6 : vector<2x128xf32>
    %9 = math.sin %8 : vector<2x128xf32>
    %c0_5 = arith.constant 0 : index
    %c0_6 = arith.constant 0 : index
    %10 = vector.load %arg4[%c0_5, %c0_6] : memref<2x128xf32, #tpu.memory_space<vmem>>, vector<2x128xf32>
    tpu.vector_store %arg4[%c0_5, %c0_6], %9 {strides = array<i32>} : memref<2x128xf32, #tpu.memory_space<vmem>>, vector<2x128xf32>,
    return
  }
  func.func @transform_0(%arg0: i32) -> (i32, i32) {
    %c0_i32 = arith.constant 0 : i32
    %c0_i32_0 = arith.constant 0 : i32
    return %arg0, %c0_i32 : i32, i32
  }
  func.func @transform_1(%arg0: i32) -> (i32, i32) {
    %c0_i32 = arith.constant 0 : i32
    %c0_i32_0 = arith.constant 0 : i32
    %c0_i32_1 = arith.constant 0 : i32
    return %c0_i32, %c0_i32_0 : i32, i32
  }
  func.func @transform_2(%arg0: i32) -> (i32, i32) {
    %c0_i32 = arith.constant 0 : i32
    %c0_i32_0 = arith.constant 0 : i32
    %c0_i32_1 = arith.constant 0 : i32
    return %c0_i32, %c0_i32_0 : i32, i32
  }
  func.func @transform_3(%arg0: i32) -> (i32, i32) {
    %c0_i32 = arith.constant 0 : i32
    %c0_i32_0 = arith.constant 0 : i32
    return %arg0, %c0_i32 : i32, i32
  }
}

</mosaic_0001>

<llo_original>
// kernel: tpu_custom_call.1
$region0: #{tpu_custom_call.1}
  #allocation0 [shape = 'u32[]', space=smem, size = 0x4, offset = 0x4, fixed_abs, tag = 'smem constant byte address 0x4 - core index']
  #allocation1 [shape = 'u32[72,128]{1,0:T(1,128)}', space=vmem, size = 0x9000, scoped, tag = 'internal scratch']
  %s0 = inlined_call_operand.hbm [shape: f32[2,128], index: 0, kind: input, shape index: {}]
  %s1 = inlined_call_operand.hbm [shape: f32[1,128], index: 1, kind: input, shape index: {}]
  %s2 = inlined_call_operand.vmem [shape: f32[1,128], index: 2, kind: input, shape index: {}]
  %s3 = inlined_call_operand.hbm [shape: f32[2,128], index: 3, kind: output, shape index: {}]
  %s4 = sld [smem:[#allocation0]]
  $region30: #{tpu_custom_call.1} parent=0
    _
  %s6 = ssub.s32 1, %s4
  %s7 = scalar_select 0, %s6, %s4
  $region1: #{tpu_custom_call.1} parent=0
    #allocation2 [shape = 'u8[1024]{0}', space=vmem, size = 0x400, scoped, tag = 'input window, operand 0, single buffered']
    #allocation3 [shape = 's32[1]{0}', space=sflag, size = 0x4, scoped, tag = 'scoped memory for tpu_custom_call.1']
    #allocation4 [shape = 's32[1]{0}', space=sflag, size = 0x4, scoped, tag = 'scoped memory for tpu_custom_call.1']
    #allocation5 [shape = 'u8[512]{0}', space=vmem, size = 0x400, scoped, tag = 'input window, operand 1, single buffered']
    #allocation6 [shape = 's32[1]{0}', space=sflag, size = 0x4, scoped, tag = 'scoped memory for tpu_custom_call.1']
    #allocation7 [shape = 'u8[1024]{0}', space=vmem, size = 0x400, scoped, tag = 'output window, operand 0, single buffered']
    %8 = vsyncpa [#allocation3], 0
    %9 = vsyncpa [#allocation6], 0
    %10 = vsyncpa [#allocation4], 0
    // Predicated region
    $region2: #{tpu_custom_call.1} parent=1 // pred_check
      _
    $region3: #{tpu_custom_call.1} parent=1 // pred_check_branch
      %12 = sbr.rel (0) target = $region5
    $region4: #{tpu_custom_call.1} parent=1 // pred_region
      %14 = vsyncadd [#allocation3], 0
      %s16 = sshll.u32 %s0, 4
      %s17 = int_to_ptr.hbm [resolvable:$true] %s16
      %s18 = sshll.u32 [#allocation2], 4
      %s19 = int_to_ptr.vmem [resolvable:$true] %s18
      %21 = dma.hbm_to_vmem [thread:$0]  %s17, 32, %s19, [#allocation3]
    $region5: #{tpu_custom_call.1} parent=1 // pred_fallthru
      _
    // Predicated region
    $region6: #{tpu_custom_call.1} parent=1 // pred_check
      _
    $region7: #{tpu_custom_call.1} parent=1 // pred_check_branch
      %23 = sbr.rel (0) target = $region9
    $region8: #{tpu_custom_call.1} parent=1 // pred_region
      %25 = vsyncadd [#allocation6], 0
      %s27 = sshll.u32 %s1, 4
      %s28 = int_to_ptr.hbm [resolvable:$true] %s27
      %s29 = sshll.u32 [#allocation5], 4
      %s30 = int_to_ptr.vmem [resolvable:$true] %s29
      %32 = dma.hbm_to_vmem [thread:$0]  %s28, 16, %s30, [#allocation6]
    $region9: #{tpu_custom_call.1} parent=1 // pred_fallthru
      _
    // Predicated region
    $region10: #{tpu_custom_call.1} parent=1 // pred_check
      _
    $region11: #{tpu_custom_call.1} parent=1 // pred_check_branch
      %34 = sbr.rel (0) target = $region13
    $region12: #{tpu_custom_call.1} parent=1 // pred_region
      _
    $region13: #{tpu_custom_call.1} parent=1 // pred_fallthru
      _
    // Predicated region
    $region14: #{tpu_custom_call.1} parent=1 // pred_check
      _
    $region15: #{tpu_custom_call.1} parent=1 // pred_check_branch
      %36 = sbr.rel (0) target = $region17
    $region16: #{tpu_custom_call.1} parent=1 // pred_region
      %38 = dma.done [#allocation3], 32
    $region17: #{tpu_custom_call.1} parent=1 // pred_fallthru
      _
    // Predicated region
    $region18: #{tpu_custom_call.1} parent=1 // pred_check
      _
    $region19: #{tpu_custom_call.1} parent=1 // pred_check_branch
      %40 = sbr.rel (0) target = $region21
    $region20: #{tpu_custom_call.1} parent=1 // pred_region
      %42 = dma.done [#allocation6], 16
    $region21: #{tpu_custom_call.1} parent=1 // pred_fallthru
      _
    %v43 = vld [vmem:[#allocation2] sm:$0x3]
    %v44 = vld [vmem:[#allocation5] sm:$0x1]
    %v46 = vperm.slane %v44, 0
    %v48 = vld [vmem:[%s2] sm:$0x1]
    %v50 = vperm.slane %v48, 0
    %v52 = vmul.f32 %v43, %v46
    %v53 = vadd.f32 %v52, %v50
    %v54 = vand.u32 2147483647, %v53
    %vm55 = vcmp.le.f32.partialorder %v54, 0.7853982
    %vm56 = vcmp.lt.s32.totalorder %v53, 0
    %v57 = vand.u32 %v53, 2139095040
    %v58 = vshrl.u32 %v57, 23
    %v59 = vsub.s32 %v58, 127
    %v60 = vand.u32 2147483647, %v53
    %v61 = vand.u32 %v60, 8388607
    %v62 = vor.u32 %v61, 8388608
    %v63 = vsub.s32 0, %v62
    %v64 = vadd.s32 %v59, 1
    %vm65 = vcmp.gt.s32.totalorder %v64, 0
    %v66 = vsel %vm65, %v64, 0
    %v67 = vshrl.u32 %v66, 5
    %v68 = vand.u32 %v66, 31
    %v69 = vsub.s32 32, %v68
    %v70 = vshrl.u32 683565275, %v69
    %v71 = vshll.u32 683565275, %v68
    %v72 = vshrl.u32 2475754826, %v69
    %v73 = vor.u32 %v71, %v72
    %v74 = vshll.u32 2475754826, %v68
    %v75 = vshrl.u32 2131351028, %v69
    %v76 = vor.u32 %v74, %v75
    %v77 = vshll.u32 2131351028, %v68
    %v78 = vshrl.u32 2102212464, %v69
    %v79 = vor.u32 %v77, %v78
    %v80 = vshll.u32 2102212464, %v68
    %v81 = vshrl.u32 920167782, %v69
    %v82 = vor.u32 %v80, %v81
    %v83 = vshll.u32 920167782, %v68
    %v84 = vshrl.u32 1326507024, %v69
    %v85 = vor.u32 %v83, %v84
    %vm86 = vcmp.lt.s32.totalorder %v67, 1
    %vm87 = vcmp.lt.s32.totalorder %v67, 2
    %vm88 = vcmp.lt.s32.totalorder %v67, 3
    %vm89 = vcmp.lt.s32.totalorder %v67, 4
    %v90 = vsel %vm86, %v70, %v73
    %v91 = vsel %vm89, %v79, 2102212464
    %v92 = vsel %vm88, %v76, %v91
    %v93 = vsel %vm87, %v90, %v92
    %v94 = vsel %vm86, %v73, %v76
    %v95 = vsel %vm89, %v82, 920167782
    %v96 = vsel %vm88, %v79, %v95
    %v97 = vsel %vm87, %v94, %v96
    %v98 = vsel %vm86, %v76, %v79
    %v99 = vsel %vm89, %v85, 1326507024
    %v100 = vsel %vm88, %v82, %v99
    %v101 = vsel %vm87, %v98, %v100
    %v102 = vshll.u32 %v62, 8
    %v103 = vand.u32 %v102, 65535
    %v104 = vshrl.u32 %v102, 16
    %v105 = vand.u32 %v101, 65535
    %v106 = vshrl.u32 %v101, 16
    %v107 = vmul.u32 %v103, %v105
    %v108 = vmul.u32 %v103, %v106
    %v109 = vmul.u32 %v104, %v105
    %v110 = vmul.u32 %v104, %v106
    %v111 = vshll.u32 %v108, 16
    %v112 = vshrl.u32 %v108, 16
    %v113 = vshll.u32 %v109, 16
    %v114 = vshrl.u32 %v109, 16
    %vm115 = vc.u32 %v107, %v111
    %v116 = vsel %vm115, 1, 0
    %v117 = vadd.s32 %v107, %v111
    %v118 = vadd.s32 %v110, %v116
    %vm119 = vc.u32 %v117, %v113
    %v120 = vsel %vm119, 1, 0
    %v121 = vadd.s32 %v117, %v113
    %v122 = vadd.s32 %v118, %v120
    %v123 = vadd.s32 %v122, %v112
    %v124 = vadd.s32 %v123, %v114
    %v125 = vand.u32 %v102, 65535
    %v126 = vshrl.u32 %v102, 16
    %v127 = vand.u32 %v97, 65535
    %v128 = vshrl.u32 %v97, 16
    %v129 = vmul.u32 %v125, %v127
    %v130 = vmul.u32 %v125, %v128
    %v131 = vmul.u32 %v126, %v127
    %v132 = vmul.u32 %v126, %v128
    %v133 = vshll.u32 %v130, 16
    %v134 = vshrl.u32 %v130, 16
    %v135 = vshll.u32 %v131, 16
    %v136 = vshrl.u32 %v131, 16
    %vm137 = vc.u32 %v129, %v133
    %v138 = vsel %vm137, 1, 0
    %v139 = vadd.s32 %v129, %v133
    %v140 = vadd.s32 %v132, %v138
    %vm141 = vc.u32 %v139, %v135
    %v142 = vsel %vm141, 1, 0
    %v143 = vadd.s32 %v139, %v135
    %v144 = vadd.s32 %v140, %v142
    %v145 = vadd.s32 %v144, %v134
    %v146 = vadd.s32 %v145, %v136
    %v147 = vmul.u32 %v102, %v93
    %v148 = vadd.s32 %v124, %v143
    %vm149 = vc.u32 %v124, %v143
    %v150 = vadd.s32 %v146, 1
    %v151 = vsel %vm149, %v150, %v146
    %v152 = vadd.s32 %v147, %v151
    %v153 = vadd.s32 %v152, 536870912
    %v154 = vshrl.u32 %v153, 30
    %v155 = vshll.u32 %v154, 30
    %v156 = vsub.s32 %v152, %v155
    %vm157 = vcmp.lt.s32.totalorder %v156, 0
    %v158 = vsub.s32 0, %v156
    %v159 = vsel %vm157, %v158, %v156
    %v160 = vclz %v159
    %v161 = vsub.s32 %v160, 2
    %vm162 = vcmp.gt.s32.totalorder 0, %v161
    %v163 = vsel %vm162, 0, %v161
    %v164 = vsub.s32 32, %v163
    %v165 = vshll.u32 %v156, %v163
    %v166 = vshrl.u32 %v148, %v164
    %v167 = vor.u32 %v165, %v166
    %v168 = vsub.s32 4294967266, %v163
    %v169 = vadd.s32 %v168, 127
    %v170 = vshll.u32 %v169, 23
    %v171 = vor.u32 4788187, %v170
    %v172 = vand.u32 2147483647, %v171
    %v174 = vcvt.s32.f32 %v167
    %v175 = vmul.f32 %v174, %v172
    %v176 = vxor.u32 %v175, 2147483648
    %v177 = vsel %vm56, %v176, %v175
    %v178 = vsub.s32 4, %v154
    %v179 = vsel %vm56, %v178, %v154
    %v180 = vsel %vm55, %v53, %v177
    %v181 = vsel %vm55, 0, %v179
    %v182 = vmul.f32 %v180, %v180
    %v183 = vmul.f32 %v182, -0.001358992
    %v184 = vadd.f32 %v183, 0.041655596
    %v185 = vmul.f32 %v182, %v184
    %v186 = vadd.f32 %v185, -0.4999988
    %v187 = vmul.f32 %v182, %v186
    %v188 = vadd.f32 1.0, %v187
    %v189 = vmul.f32 %v180, %v180
    %v190 = vmul.f32 %v189, -0.00019511016
    %v191 = vadd.f32 %v190, 0.008332121
    %v192 = vmul.f32 %v189, %v191
    %v193 = vadd.f32 %v192, -0.16666654
    %v194 = vmul.f32 %v189, %v193
    %v195 = vadd.f32 %v194, 1.0
    %v196 = vmul.f32 %v195, %v180
    %vm197 = vweird.f32 %v53
    %v198 = vadd.s32 %v181, 3
    %v199 = vand.u32 %v198, 3
    %vm200 = vcmp.lt.s32.totalorder %v199, 2
    %vm201 = vcmp.eq.s32.totalorder %v199, 0
    %v202 = vxor.u32 %v196, 2147483648
    %v203 = vsel %vm201, %v188, %v202
    %vm204 = vcmp.eq.s32.totalorder %v199, 2
    %v205 = vxor.u32 %v188, 2147483648
    %v206 = vsel %vm204, %v205, %v196
    %v207 = vsel %vm200, %v203, %v206
    %v208 = vsel %vm197, nan, %v207
    %209 = vst [vmem:[#allocation7] sm:$0x3] %v208
    // Predicated region
    $region22: #{tpu_custom_call.1} parent=1 // pred_check
      _
    $region23: #{tpu_custom_call.1} parent=1 // pred_check_branch
      %211 = sbr.rel (0) target = $region25
    $region24: #{tpu_custom_call.1} parent=1 // pred_region
      %213 = vsyncadd [#allocation4], 0
      %s215 = sshll.u32 [#allocation7], 4
      %s216 = int_to_ptr.vmem [resolvable:$true] %s215
      %s217 = sshll.u32 %s3, 4
      %s218 = int_to_ptr.hbm [resolvable:$true] %s217
      %220 = dma.vmem_to_hbm [thread:$0]  %s216, 32, %s218, [#allocation4]
    $region25: #{tpu_custom_call.1} parent=1 // pred_fallthru
      _
    // Predicated region
    $region26: #{tpu_custom_call.1} parent=1 // pred_check
      _
    $region27: #{tpu_custom_call.1} parent=1 // pred_check_branch
      %222 = sbr.rel (0) target = $region29
    $region28: #{tpu_custom_call.1} parent=1 // pred_region
      %224 = dma.done [#allocation4], 32
    $region29: #{tpu_custom_call.1} parent=1 // pred_fallthru
      _
    %225 = vsyncpa [#allocation3], 1
    %226 = vsyncpa [#allocation6], 1
    %227 = vsyncpa [#allocation4], 1

</llo_original>
